<compile_context>
chip_gen: v5e
topology: v5e:2x2
jax: 0.10.0
libtpu: 0.0.40
codegen_flags: <defaults>
</compile_context>

<pallas_src>
import functools

import jax
import jax.numpy as jnp
from jax.experimental import pallas as pl
from jax.experimental.pallas import tpu as pltpu

_LANE = 128


def _round_up(x, m):
    return ((x + m - 1) // m) * m


def _round_down(x, m):
    return (x // m) * m


def _pick_tiles(n_rows, n_cols, itemsize):
    """Tile choice with a generation-safe VMEM budget (~2 MiB per logits buffer)."""
    row_bytes = n_cols * itemsize
    if row_bytes <= 8 * 1024:        # small vocab: big row tiles amortize step overhead
        tr = 1024
    elif row_bytes <= 32 * 1024:
        tr = 512
    else:
        tr = 256
    tr = min(tr, _round_up(n_rows, 8))
    # Vocab tile targeting ~2 MiB per pipeline buffer: constant VMEM regardless of V,
    # comfortably inside v7x's 64 MiB physical VMEM and v5e/v6e scoped defaults.
    target_bytes = 2 * 1024 * 1024
    tv = _round_down(max(_LANE, target_bytes // (tr * itemsize)), _LANE)
    if tv >= n_cols:
        tv = n_cols                  # whole vocab in one block (full last dim)
    return tr, tv


def _make_logits_spec(tr, tv, multi_block):
    index_map = lambda i, k: (i, k)
    buffered = getattr(pl, "Buffered", None)
    if multi_block and buffered is not None:
        try:
            # Deeper buffering hides the smaller per-step DMAs along the vocab axis.
            return pl.BlockSpec((tr, tv), index_map, pipeline_mode=buffered(3))
        except TypeError:
            pass
    return pl.BlockSpec((tr, tv), index_map)


def _ce_fwd_kernel(labels_ref, logits_ref, loss_ref, zloss_ref,
                   m_ref, l_ref, wsum_ref, *,
                   label_smoothing, logit_scale, lse_square_scale,
                   ignore_index, total_classes, n_cols, block_cols, mask_cols):
    # labels_ref: (TR, 1) int32 ; logits_ref: (TR, TV) ; outputs: (TR, 1) f32
    k = pl.program_id(1)
    nk = pl.num_programs(1)

    @pl.when(k == 0)
    def _init():
        m_ref[...] = jnp.full_like(m_ref, -jnp.inf)
        l_ref[...] = jnp.zeros_like(l_ref)
        wsum_ref[...] = jnp.zeros_like(wsum_ref)

    labels = labels_ref[...]                                     # (TR, 1) int32
    x = logits_ref[...].astype(jnp.float32) * logit_scale        # (TR, TV) f32

    # Global column index of each element of this vocab tile.
    col = jax.lax.broadcasted_iota(jnp.int32, x.shape, 1) + k * block_cols
    if mask_cols:
        in_bounds = col < n_cols
        x_lse = jnp.where(in_bounds, x, -jnp.inf)
    else:
        in_bounds = None
        x_lse = x

    # --- online logsumexp over the vocab axis ---
    m_prev = m_ref[...]
    m_new = jnp.maximum(m_prev, jnp.max(x_lse, axis=-1, keepdims=True))
    alpha = jnp.exp(m_prev - m_new)                              # 0 on the first tile
    p = jnp.exp(x_lse - m_new)                                   # masked cols -> 0
    l_ref[...] = alpha * l_ref[...] + jnp.sum(p, axis=-1, keepdims=True)
    m_ref[...] = m_new

    # --- fused one-hot gather + label-smoothing sum: single weighted reduction ---
    onehot = col == labels
    if label_smoothing > 0.0:
        w = (jnp.where(onehot, 1.0 - label_smoothing, 0.0)
             + (label_smoothing / total_classes))
    else:
        w = jnp.where(onehot, 1.0, 0.0)
    contrib = w * x
    if mask_cols:
        contrib = jnp.where(in_bounds, contrib, 0.0)
    wsum_ref[...] = wsum_ref[...] + jnp.sum(contrib, axis=-1, keepdims=True)

    @pl.when(k == nk - 1)
    def _finalize():
        lse = m_ref[...] + jnp.log(l_ref[...])
        z = lse_square_scale * lse * lse
        loss = lse - wsum_ref[...] + z
        valid = labels != ignore_index
        loss_ref[...] = jnp.where(valid, loss, 0.0)
        zloss_ref[...] = jnp.where(valid, z, 0.0)


def fused_cross_entropy_forward(logits, target, *,
                                label_smoothing=0.0, logit_scale=1.0,
                                lse_square_scale=0.0, ignore_index=-100,
                                block_rows=None, block_cols=None):
    """Returns per-row (losses, z_losses), both f32 of shape (N,)."""
    n_rows, n_cols = logits.shape
    assert target.shape == (n_rows,)

    itemsize = jnp.dtype(logits.dtype).itemsize
    tr, tv = _pick_tiles(n_rows, n_cols, itemsize)
    if block_rows is not None:
        tr = int(block_rows)
    if block_cols is not None:
        tv = int(block_cols)
    assert tr % 8 == 0, "row block must be a multiple of 8"
    assert tv == n_cols or tv % _LANE == 0, "vocab block must be a multiple of 128"

    # Pad rows so the row block divides (padded labels get ignore_index -> loss 0).
    n_rows_pad = _round_up(n_rows, tr)
    target_i = target.astype(jnp.int32)
    if n_rows_pad != n_rows:
        logits = jnp.pad(logits, ((0, n_rows_pad - n_rows), (0, 0)))
        target_i = jnp.pad(target_i, (0, n_rows_pad - n_rows),
                           constant_values=ignore_index)
    labels2d = target_i.reshape(n_rows_pad, 1)

    num_v_blocks = int(pl.cdiv(n_cols, tv))
    mask_cols = (n_cols % tv) != 0

    kernel = functools.partial(
        _ce_fwd_kernel,
        label_smoothing=float(label_smoothing),
        logit_scale=float(logit_scale),
        lse_square_scale=float(lse_square_scale),
        ignore_index=int(ignore_index),
        total_classes=int(n_cols),
        n_cols=int(n_cols),
        block_cols=int(tv),
        mask_cols=bool(mask_cols),
    )

    losses, z_losses = pl.pallas_call(
        kernel,
        out_shape=(jax.ShapeDtypeStruct((n_rows_pad, 1), jnp.float32),
                   jax.ShapeDtypeStruct((n_rows_pad, 1), jnp.float32)),
        grid_spec=pltpu.PrefetchScalarGridSpec(
            num_scalar_prefetch=0,
            grid=(n_rows_pad // tr, num_v_blocks),
            in_specs=[
                pl.BlockSpec((tr, 1), lambda i, k: (i, 0)),        # labels
                _make_logits_spec(tr, tv, num_v_blocks > 1),       # streamed logits
            ],
            out_specs=[
                pl.BlockSpec((tr, 1), lambda i, k: (i, 0)),        # loss
                pl.BlockSpec((tr, 1), lambda i, k: (i, 0)),        # z_loss
            ],
            scratch_shapes=[
                pltpu.VMEM((tr, 1), jnp.float32),   # running max m
                pltpu.VMEM((tr, 1), jnp.float32),   # rescaled exp-sum l
                pltpu.VMEM((tr, 1), jnp.float32),   # accumulated weighted logit sum
            ],
        ),
        compiler_params=pltpu.CompilerParams(
            dimension_semantics=("parallel", "arbitrary"),
            vmem_limit_bytes=32 * 1024 * 1024,
        ),
    )(labels2d, logits)

    return losses[:n_rows, 0], z_losses[:n_rows, 0]


class FusedCrossEntropyLoss:
    """Forward-only JAX/Pallas port of fla FusedCrossEntropyLoss."""

    def __init__(self, ignore_index=-100, reduction="mean",
                 label_smoothing=0.0, logit_scale=1.0, lse_square_scale=0.0,
                 return_z_loss=False, block_rows=None, block_cols=None):
        if reduction not in ("mean", "none", "sum"):
            raise NotImplementedError("Only support reduction = 'mean'/'none'/'sum'")
        self.ignore_index = ignore_index
        self.reduction = reduction
        self.label_smoothing = label_smoothing
        self.logit_scale = logit_scale
        self.lse_square_scale = lse_square_scale
        self.return_z_loss = return_z_loss
        self.block_rows = block_rows
        self.block_cols = block_cols
        # TODO(synk): backward (dlogits) kernel and process_group/all-gather split
        # path are not implemented; forward only.

    def __call__(self, input, target):
        loss, z_loss = fused_cross_entropy_forward(
            input, target,
            label_smoothing=self.label_smoothing,
            logit_scale=self.logit_scale,
            lse_square_scale=self.lse_square_scale,
            ignore_index=self.ignore_index,
            block_rows=self.block_rows,
            block_cols=self.block_cols,
        )
        if self.reduction == "mean":
            # Matches the PyTorch reference: 0/0 -> NaN if every row is ignored.
            denom = jnp.sum((target != self.ignore_index).astype(jnp.float32))
            loss = jnp.sum(loss) / denom
            z_loss_red = jnp.sum(z_loss) / denom
        elif self.reduction == "sum":
            loss = jnp.sum(loss)
            z_loss_red = jnp.sum(z_loss)
        else:
            z_loss_red = z_loss
        if not self.return_z_loss:
            return loss
        return loss, z_loss_red


def _reference(logits, target, *, label_smoothing, logit_scale,
               lse_square_scale, ignore_index):
    x = logits.astype(jnp.float32) * logit_scale
    n_rows, n_cols = x.shape
    lse = jax.scipy.special.logsumexp(x, axis=-1)
    label_logit = jnp.take_along_axis(
        x, jnp.clip(target, 0, n_cols - 1)[:, None].astype(jnp.int32), axis=-1)[:, 0]
    if label_smoothing > 0.0:
        loss = (lse
                - label_smoothing * jnp.sum(x, axis=-1) / n_cols
                - (1.0 - label_smoothing) * label_logit)
    else:
        loss = lse - label_logit
    z = lse_square_scale * lse * lse
    loss = loss + z
    valid = target != ignore_index
    return jnp.where(valid, loss, 0.0), jnp.where(valid, z, 0.0)


if __name__ == "__main__":
    key = jax.random.PRNGKey(0)
    k1, k2, k3, k4 = jax.random.split(key, 4)

    cfg = dict(label_smoothing=0.1, logit_scale=0.5,
               lse_square_scale=1e-4, ignore_index=-100)

    # --- Case 1: f32 logits, single vocab tile, mean reduction -----------------
    N1, V1 = 8, 512
    logits1 = jax.random.normal(k1, (N1, V1), dtype=jnp.float32)
    target1 = jax.random.randint(k2, (N1,), 0, V1, dtype=jnp.int32)
    target1 = target1.at[3].set(-100)   # one ignored row

    mod = FusedCrossEntropyLoss(reduction="mean", return_z_loss=True, **cfg)
    loss1, zloss1 = mod(logits1, target1)
    loss1 = jax.block_until_ready(loss1)
    zloss1 = jax.block_until_ready(zloss1)

    ref_l1, ref_z1 = _reference(logits1, target1, **cfg)
    denom = jnp.sum((target1 != -100).astype(jnp.float32))
    assert jnp.allclose(loss1, jnp.sum(ref_l1) / denom, rtol=1e-5, atol=1e-5)
    assert jnp.allclose(zloss1, jnp.sum(ref_z1) / denom, rtol=1e-5, atol=1e-5)

    # 'none' reduction path
    per_row = FusedCrossEntropyLoss(reduction="none", **cfg)(logits1, target1)
    per_row = jax.block_until_ready(per_row)
    assert jnp.allclose(per_row, ref_l1, rtol=1e-5, atol=1e-5)

    # --- Case 2: bf16 logits, forced vocab tiling (online lse), ragged vocab ---
    #             tail masking (V=300, tv=128) and row padding (N=10, tr=8).
    N2, V2 = 10, 300
    logits2 = jax.random.normal(k3, (N2, V2), dtype=jnp.float32).astype(jnp.bfloat16)
    target2 = jax.random.randint(k4, (N2,), 0, V2, dtype=jnp.int32)
    target2 = target2.at[5].set(-100)

    l2, z2 = fused_cross_entropy_forward(
        logits2, target2, block_rows=8, block_cols=128, **cfg)
    l2 = jax.block_until_ready(l2)
    z2 = jax.block_until_ready(z2)

    ref_l2, ref_z2 = _reference(logits2, target2, **cfg)
    assert jnp.allclose(l2, ref_l2, rtol=1e-4, atol=1e-4)
    assert jnp.allclose(z2, ref_z2, rtol=1e-4, atol=1e-4)

    print("KERNEL_OK")
</pallas_src>

<mosaic_0001>
module attributes {stable_mosaic.version = 11 : i64} {
  func.func @_ce_fwd_kernel(%arg0: i32, %arg1: i32, %arg2: memref<8x1xi32, #tpu.memory_space<vmem>>, %arg3: memref<8x512xf32, #tpu.memory_space<vmem>>, %arg4: memref<8x1xf32, #tpu.memory_space<vmem>>, %arg5: memref<8x1xf32, #tpu.memory_space<vmem>>, %arg6: memref<8x1xf32, #tpu.memory_space<vmem>>, %arg7: memref<8x1xf32, #tpu.memory_space<vmem>>, %arg8: memref<8x1xf32, #tpu.memory_space<vmem>>) attributes {dimension_semantics = [#tpu.dimension_semantics<parallel>, #tpu.dimension_semantics<arbitrary>], iteration_bounds = array<i64: 1, 1>, scalar_prefetch = 0 : i64, scratch_operands = 3 : i64, tpu.core_type = #tpu.core_type<tc>, window_params = [{transform_indices = @transform_0, window_bounds = array<i64: 8, 1>}, {transform_indices = @transform_1, window_bounds = array<i64: 8, 512>}, {transform_indices = @transform_2, window_bounds = array<i64: 8, 1>}, {transform_indices = @transform_3, window_bounds = array<i64: 8, 1>}]} {
    %c0_i32 = arith.constant 0 : i32
    %0 = arith.cmpi eq, %arg1, %c0_i32 : i32
    %1 = arith.extui %0 : i1 to i32
    %c0_i32_0 = arith.constant 0 : i32
    %2 = arith.cmpi ne, %1, %c0_i32_0 : i32
    scf.if %2 {
      %cst_24 = arith.constant 0xFF800000 : f32
      %43 = vector.broadcast %cst_24 : f32 to vector<8x1xf32>
      %c0_25 = arith.constant 0 : index
      %c0_26 = arith.constant 0 : index
      %44 = vector.load %arg6[%c0_25, %c0_26] : memref<8x1xf32, #tpu.memory_space<vmem>>, vector<8x1xf32>
      tpu.vector_store %arg6[%c0_25, %c0_26], %43 {strides = array<i32>} : memref<8x1xf32, #tpu.memory_space<vmem>>, vector<8x1xf32>,
      %cst_27 = arith.constant 0.000000e+00 : f32
      %45 = vector.broadcast %cst_27 : f32 to vector<8x1xf32>
      %c0_28 = arith.constant 0 : index
      %c0_29 = arith.constant 0 : index
      %46 = vector.load %arg7[%c0_28, %c0_29] : memref<8x1xf32, #tpu.memory_space<vmem>>, vector<8x1xf32>
      tpu.vector_store %arg7[%c0_28, %c0_29], %45 {strides = array<i32>} : memref<8x1xf32, #tpu.memory_space<vmem>>, vector<8x1xf32>,
      %cst_30 = arith.constant 0.000000e+00 : f32
      %47 = vector.broadcast %cst_30 : f32 to vector<8x1xf32>
      %c0_31 = arith.constant 0 : index
      %c0_32 = arith.constant 0 : index
      %48 = vector.load %arg8[%c0_31, %c0_32] : memref<8x1xf32, #tpu.memory_space<vmem>>, vector<8x1xf32>
      tpu.vector_store %arg8[%c0_31, %c0_32], %47 {strides = array<i32>} : memref<8x1xf32, #tpu.memory_space<vmem>>, vector<8x1xf32>,
    } else {
    }
    %c0 = arith.constant 0 : index
    %c0_1 = arith.constant 0 : index
    %3 = vector.load %arg2[%c0, %c0_1] : memref<8x1xi32, #tpu.memory_space<vmem>>, vector<8x1xi32>
    %c0_2 = arith.constant 0 : index
    %c0_3 = arith.constant 0 : index
    %4 = vector.load %arg3[%c0_2, %c0_3] : memref<8x512xf32, #tpu.memory_space<vmem>>, vector<8x512xf32>
    %cst = arith.constant 5.000000e-01 : f32
    %5 = vector.broadcast %cst : f32 to vector<8x512xf32>
    %6 = arith.mulf %4, %5 : vector<8x512xf32>
    %7 = tpu.iota {dimensions = array<i32: 1>} : vector<8x512xi32>
    %c512_i32 = arith.constant 512 : i32
    %8 = arith.muli %arg1, %c512_i32 : i32
    %9 = vector.broadcast %8 : i32 to vector<8x512xi32>
    %10 = arith.addi %7, %9 : vector<8x512xi32>
    %c0_4 = arith.constant 0 : index
    %c0_5 = arith.constant 0 : index
    %11 = vector.load %arg6[%c0_4, %c0_5] : memref<8x1xf32, #tpu.memory_space<vmem>>, vector<8x1xf32>
    %cst_6 = arith.constant dense<0xFF800000> : vector<8xf32>
    %12 = vector.multi_reduction <maximumf>, %6, %cst_6 [1] : vector<8x512xf32> to vector<8xf32>
    %13 = vector.shape_cast %12 : vector<8xf32> to vector<8x1xf32>
    %14 = arith.maximumf %11, %13 : vector<8x1xf32>
    %15 = arith.subf %11, %14 : vector<8x1xf32>
    %16 = math.exp %15 : vector<8x1xf32>
    %17 = vector.broadcast %14 : vector<8x1xf32> to vector<8x512xf32>
    %18 = arith.subf %6, %17 : vector<8x512xf32>
    %19 = math.exp %18 : vector<8x512xf32>
    %c0_7 = arith.constant 0 : index
    %c0_8 = arith.constant 0 : index
    %20 = vector.load %arg7[%c0_7, %c0_8] : memref<8x1xf32, #tpu.memory_space<vmem>>, vector<8x1xf32>
    %21 = arith.mulf %16, %20 : vector<8x1xf32>
    %cst_9 = arith.constant dense<0.000000e+00> : vector<8xf32>
    %22 = vector.multi_reduction <add>, %19, %cst_9 [1] : vector<8x512xf32> to vector<8xf32>
    %23 = vector.shape_cast %22 : vector<8xf32> to vector<8x1xf32>
    %24 = arith.addf %21, %23 : vector<8x1xf32>
    %c0_10 = arith.constant 0 : index
    %c0_11 = arith.constant 0 : index
    %25 = vector.load %arg7[%c0_10, %c0_11] : memref<8x1xf32, #tpu.memory_space<vmem>>, vector<8x1xf32>
    tpu.vector_store %arg7[%c0_10, %c0_11], %24 {strides = array<i32>} : memref<8x1xf32, #tpu.memory_space<vmem>>, vector<8x1xf32>,
    %c0_12 = arith.constant 0 : index
    %c0_13 = arith.constant 0 : index
    %26 = vector.load %arg6[%c0_12, %c0_13] : memref<8x1xf32, #tpu.memory_space<vmem>>, vector<8x1xf32>
    tpu.vector_store %arg6[%c0_12, %c0_13], %14 {strides = array<i32>} : memref<8x1xf32, #tpu.memory_space<vmem>>, vector<8x1xf32>,
    %27 = vector.broadcast %3 : vector<8x1xi32> to vector<8x512xi32>
    %28 = arith.cmpi eq, %10, %27 : vector<8x512xi32>
    %cst_14 = arith.constant 0.899999976 : f32
    %cst_15 = arith.constant 0.000000e+00 : f32
    %29 = vector.broadcast %cst_14 : f32 to vector<8x512xf32>
    %30 = vector.broadcast %cst_15 : f32 to vector<8x512xf32>
    %31 = arith.select %28, %29, %30 : vector<8x512xi1>, vector<8x512xf32>
    %cst_16 = arith.constant 1.95312503E-4 : f32
    %32 = vector.broadcast %cst_16 : f32 to vector<8x512xf32>
    %33 = arith.addf %31, %32 : vector<8x512xf32>
    %34 = arith.mulf %33, %6 : vector<8x512xf32>
    %c0_17 = arith.constant 0 : index
    %c0_18 = arith.constant 0 : index
    %35 = vector.load %arg8[%c0_17, %c0_18] : memref<8x1xf32, #tpu.memory_space<vmem>>, vector<8x1xf32>
    %cst_19 = arith.constant dense<0.000000e+00> : vector<8xf32>
    %36 = vector.multi_reduction <add>, %34, %cst_19 [1] : vector<8x512xf32> to vector<8xf32>
    %37 = vector.shape_cast %36 : vector<8xf32> to vector<8x1xf32>
    %38 = arith.addf %35, %37 : vector<8x1xf32>
    %c0_20 = arith.constant 0 : index
    %c0_21 = arith.constant 0 : index
    %39 = vector.load %arg8[%c0_20, %c0_21] : memref<8x1xf32, #tpu.memory_space<vmem>>, vector<8x1xf32>
    tpu.vector_store %arg8[%c0_20, %c0_21], %38 {strides = array<i32>} : memref<8x1xf32, #tpu.memory_space<vmem>>, vector<8x1xf32>,
    %c0_i32_22 = arith.constant 0 : i32
    %40 = arith.cmpi eq, %arg1, %c0_i32_22 : i32
    %41 = arith.extui %40 : i1 to i32
    %c0_i32_23 = arith.constant 0 : i32
    %42 = arith.cmpi ne, %41, %c0_i32_23 : i32
    scf.if %42 {
      %c0_24 = arith.constant 0 : index
      %c0_25 = arith.constant 0 : index
      %43 = vector.load %arg6[%c0_24, %c0_25] : memref<8x1xf32, #tpu.memory_space<vmem>>, vector<8x1xf32>
      %c0_26 = arith.constant 0 : index
      %c0_27 = arith.constant 0 : index
      %44 = vector.load %arg7[%c0_26, %c0_27] : memref<8x1xf32, #tpu.memory_space<vmem>>, vector<8x1xf32>
      %45 = math.log %44 : vector<8x1xf32>
      %46 = arith.addf %43, %45 : vector<8x1xf32>
      %cst_28 = arith.constant 9.99999974E-5 : f32
      %47 = vector.broadcast %cst_28 : f32 to vector<8x1xf32>
      %48 = arith.mulf %47, %46 : vector<8x1xf32>
      %49 = arith.mulf %48, %46 : vector<8x1xf32>
      %c0_29 = arith.constant 0 : index
      %c0_30 = arith.constant 0 : index
      %50 = vector.load %arg8[%c0_29, %c0_30] : memref<8x1xf32, #tpu.memory_space<vmem>>, vector<8x1xf32>
      %51 = arith.subf %46, %50 : vector<8x1xf32>
      %52 = arith.addf %51, %49 : vector<8x1xf32>
      %c-100_i32 = arith.constant -100 : i32
      %53 = vector.broadcast %c-100_i32 : i32 to vector<8x1xi32>
      %54 = arith.cmpi ne, %3, %53 : vector<8x1xi32>
      %cst_31 = arith.constant 0.000000e+00 : f32
      %55 = vector.broadcast %cst_31 : f32 to vector<8x1xf32>
      %56 = arith.select %54, %52, %55 : vector<8x1xi1>, vector<8x1xf32>
      %c0_32 = arith.constant 0 : index
      %c0_33 = arith.constant 0 : index
      %57 = vector.load %arg4[%c0_32, %c0_33] : memref<8x1xf32, #tpu.memory_space<vmem>>, vector<8x1xf32>
      tpu.vector_store %arg4[%c0_32, %c0_33], %56 {strides = array<i32>} : memref<8x1xf32, #tpu.memory_space<vmem>>, vector<8x1xf32>,
      %cst_34 = arith.constant 0.000000e+00 : f32
      %58 = vector.broadcast %cst_34 : f32 to vector<8x1xf32>
      %59 = arith.select %54, %49, %58 : vector<8x1xi1>, vector<8x1xf32>
      %c0_35 = arith.constant 0 : index
      %c0_36 = arith.constant 0 : index
      %60 = vector.load %arg5[%c0_35, %c0_36] : memref<8x1xf32, #tpu.memory_space<vmem>>, vector<8x1xf32>
      tpu.vector_store %arg5[%c0_35, %c0_36], %59 {strides = array<i32>} : memref<8x1xf32, #tpu.memory_space<vmem>>, vector<8x1xf32>,
    } else {
    }
    return
  }
  func.func @transform_0(%arg0: i32, %arg1: i32) -> (i32, i32) {
    %c0_i32 = arith.constant 0 : i32
    %c0_i32_0 = arith.constant 0 : i32
    return %arg0, %c0_i32 : i32, i32
  }
  func.func @transform_1(%arg0: i32, %arg1: i32) -> (i32, i32) {
    %c0_i32 = arith.constant 0 : i32
    return %arg0, %arg1 : i32, i32
  }
  func.func @transform_2(%arg0: i32, %arg1: i32) -> (i32, i32) {
    %c0_i32 = arith.constant 0 : i32
    %c0_i32_0 = arith.constant 0 : i32
    return %arg0, %c0_i32 : i32, i32
  }
  func.func @transform_3(%arg0: i32, %arg1: i32) -> (i32, i32) {
    %c0_i32 = arith.constant 0 : i32
    %c0_i32_0 = arith.constant 0 : i32
    return %arg0, %c0_i32 : i32, i32
  }
}

</mosaic_0001>

<llo_original>
// kernel: tpu_custom_call.1
$region0: #{tpu_custom_call.1}
  #allocation0 [shape = 'u32[]', space=smem, size = 0x4, offset = 0x4, fixed_abs, tag = 'smem constant byte address 0x4 - core index']
  #allocation1 [shape = 'u32[72,128]{1,0:T(1,128)}', space=vmem, size = 0x9000, scoped, tag = 'internal scratch']
  #allocation2 [shape = 'f32[8,1]{1,0:T(8,128)}', space=vmem, size = 0x1000, scoped, tag = 'scratch operand']
  #allocation3 [shape = 'f32[8,1]{1,0:T(8,128)}', space=vmem, size = 0x1000, scoped, tag = 'scratch operand']
  #allocation4 [shape = 'f32[8,1]{1,0:T(8,128)}', space=vmem, size = 0x1000, scoped, tag = 'scratch operand']
  %s0 = inlined_call_operand.vmem [shape: s32[8,1], index: 0, kind: input, shape index: {}]
  %s1 = inlined_call_operand.hbm [shape: f32[8,512], index: 1, kind: input, shape index: {}]
  %s2 = inlined_call_operand.vmem [shape: f32[8,1], index: 2, kind: output, shape index: {0}]
  %s3 = inlined_call_operand.vmem [shape: f32[8,1], index: 3, kind: output, shape index: {1}]
  %4 = xla_tuple %s2, %s3
  %s5 = sld [smem:[#allocation0]]
  $region38: #{tpu_custom_call.1} parent=0
    _
  %s7 = ssub.s32 1, %s5
  %s8 = scalar_select 0, %s7, %s5
  $region1: #{tpu_custom_call.1} parent=0
    #allocation5 [shape = 'u8[16384]{0}', space=vmem, size = 0x4000, scoped, tag = 'input window, operand 1, single buffered']
    #allocation6 [shape = 's32[1]{0}', space=sflag, size = 0x4, scoped, tag = 'scoped memory for tpu_custom_call.1']
    %9 = vsyncpa [#allocation6], 0
    // Predicated region
    $region2: #{tpu_custom_call.1} parent=1 // pred_check
      _
    $region3: #{tpu_custom_call.1} parent=1 // pred_check_branch
      %11 = sbr.rel (0) target = $region5
    $region4: #{tpu_custom_call.1} parent=1 // pred_region
      _
    $region5: #{tpu_custom_call.1} parent=1 // pred_fallthru
      _
    // Predicated region
    $region6: #{tpu_custom_call.1} parent=1 // pred_check
      _
    $region7: #{tpu_custom_call.1} parent=1 // pred_check_branch
      %13 = sbr.rel (0) target = $region9
    $region8: #{tpu_custom_call.1} parent=1 // pred_region
      %15 = vsyncadd [#allocation6], 0
      %s17 = sshll.u32 %s1, 4
      %s18 = int_to_ptr.hbm [resolvable:$true] %s17
      %s19 = sshll.u32 [#allocation5], 4
      %s20 = int_to_ptr.vmem [resolvable:$true] %s19
      %22 = dma.hbm_to_vmem [thread:$0]  %s18, 512, %s20, [#allocation6]
    $region9: #{tpu_custom_call.1} parent=1 // pred_fallthru
      _
    // Predicated region
    $region10: #{tpu_custom_call.1} parent=1 // pred_check
      _
    $region11: #{tpu_custom_call.1} parent=1 // pred_check_branch
      %24 = sbr.rel (0) target = $region13
    $region12: #{tpu_custom_call.1} parent=1 // pred_region
      %26 = dma.done [#allocation6], 512
    $region13: #{tpu_custom_call.1} parent=1 // pred_fallthru
      _
    %p27 = scmp.eq.s32.totalorder 0, 0
    // Predicated region
    $region14: #{tpu_custom_call.1} parent=1 // pred_check
      %p28 = pneg %p27
    $region15: #{tpu_custom_call.1} parent=1 // pred_check_branch
      %30 = sbr.rel (%p28) target = $region17
    $region16: #{tpu_custom_call.1} parent=1 // pred_region
      %vm31 = vcmask 7168
      %32 = vst.msk [vmem:[#allocation2] sm:$0xff] %vm31, -inf
      %33 = vst.msk [vmem:[#allocation3] sm:$0xff] %vm31, 0.0
      %34 = vst.msk [vmem:[#allocation4] sm:$0xff] %vm31, 0.0
    $region17: #{tpu_custom_call.1} parent=1 // pred_fallthru
      _
    %v35 = vld [vmem:[%s0] sm:$0xff]
    %v36 = vld [vmem:[#allocation5] sm:$0xff]
    %v37 = vld [vmem:[#allocation5 + $0x8] sm:$0xff]
    %v38 = vld [vmem:[#allocation5 + $0x10] sm:$0xff]
    %v39 = vld [vmem:[#allocation5 + $0x18] sm:$0xff]
    %v40 = vmul.f32 %v36, 0.5
    %v41 = vmul.f32 %v37, 0.5
    %v42 = vmul.f32 %v38, 0.5
    %v43 = vmul.f32 %v39, 0.5
    %v44 = vlaneseq
    %v45 = vand.u32 %v44, 127
    %v46 = vadd.s32 %v45, 128
    %v47 = vadd.s32 %v45, 256
    %v48 = vadd.s32 %v45, 384
    %s49 = smul.u32 0, 512
    %v50 = vstv %s49
    %v51 = vadd.s32 %v45, %v50
    %v52 = vadd.s32 %v46, %v50
    %v53 = vadd.s32 %v47, %v50
    %v54 = vadd.s32 %v48, %v50
    %v55 = vld [vmem:[#allocation2] sm:$0xff]
    %v56 = vmax.f32 %v40, %v41
    %v57 = vmax.f32 %v42, %v43
    %v58 = vmax.f32 %v56, %v57
    %59 = vmax.xlane.f32.xlu0 %v58
    %v60 = vpop.xlane.xlu0 %59
    %v61 = vmax.f32 %v55, %v60
    %v62 = vsub.f32 %v55, %v61
    %v63 = vmul.f32 %v62, 1.442695
    %v64 = vpow.pop %v63
    %66 = vset.pattern.permute.xlu0 0
    %67 = vperm.xlu0 %66, %v61
    %v68 = vpop.permute.xlu0 %67
    %v70 = vsub.f32 %v40, %v68
    %v71 = vsub.f32 %v41, %v68
    %v72 = vsub.f32 %v42, %v68
    %v73 = vsub.f32 %v43, %v68
    %v74 = vmul.f32 %v70, 1.442695
    %v75 = vpow.pop %v74
    %v76 = vmul.f32 %v71, 1.442695
    %v77 = vpow.pop %v76
    %v78 = vmul.f32 %v72, 1.442695
    %v79 = vpow.pop %v78
    %v80 = vmul.f32 %v73, 1.442695
    %v81 = vpow.pop %v80
    %v82 = vld [vmem:[#allocation3] sm:$0xff]
    %v83 = vmul.f32 %v64, %v82
    %v84 = vadd.f32 %v75, %v77
    %v85 = vadd.f32 %v84, %v79
    %v86 = vadd.f32 %v85, %v81
    %87 = vadd.xlane.f32.xlu0 %v86
    %v88 = vpop.xlane.xlu0 %87
    %v89 = vadd.f32 %v83, %v88
    %vm90 = vcmask 7168
    %91 = vst.msk [vmem:[#allocation3] sm:$0xff] %vm90, %v89
    %92 = vst.msk [vmem:[#allocation2] sm:$0xff] %vm90, %v61
    %93 = vset.pattern.permute.xlu0 0
    %94 = vperm.xlu0 %93, %v35
    %v95 = vpop.permute.xlu0 %94
    %vm96 = vcmp.eq.s32.totalorder %v51, %v95
    %vm97 = vcmp.eq.s32.totalorder %v52, %v95
    %vm98 = vcmp.eq.s32.totalorder %v53, %v95
    %vm99 = vcmp.eq.s32.totalorder %v54, %v95
    %v100 = vsel %vm96, 0.9, 0.0
    %v101 = vsel %vm97, 0.9, 0.0
    %v102 = vsel %vm98, 0.9, 0.0
    %v103 = vsel %vm99, 0.9, 0.0
    %v104 = vadd.f32 %v100, 0.0001953125
    %v105 = vadd.f32 %v101, 0.0001953125
    %v106 = vadd.f32 %v102, 0.0001953125
    %v107 = vadd.f32 %v103, 0.0001953125
    %v108 = vmul.f32 %v104, %v40
    %v109 = vmul.f32 %v105, %v41
    %v110 = vmul.f32 %v106, %v42
    %v111 = vmul.f32 %v107, %v43
    %v112 = vld [vmem:[#allocation4] sm:$0xff]
    %v113 = vadd.f32 %v108, %v109
    %v114 = vadd.f32 %v113, %v110
    %v115 = vadd.f32 %v114, %v111
    %116 = vadd.xlane.f32.xlu0 %v115
    %v117 = vpop.xlane.xlu0 %116
    %v118 = vadd.f32 %v112, %v117
    %119 = vst.msk [vmem:[#allocation4] sm:$0xff] %vm90, %v118
    // Predicated region
    $region18: #{tpu_custom_call.1} parent=1 // pred_check
      %p120 = pneg %p27
    $region19: #{tpu_custom_call.1} parent=1 // pred_check_branch
      %122 = sbr.rel (%p120) target = $region21
    $region20: #{tpu_custom_call.1} parent=1 // pred_region
      %v123 = vld [vmem:[#allocation2] sm:$0xff]
      %v124 = vld [vmem:[#allocation3] sm:$0xff]
      %v125 = vlog2.pop %v124
      %v126 = vmul.f32 %v125, 0.6931472
      %v127 = vadd.f32 %v123, %v126
      %v128 = vmul.f32 %v127, 0.0001
      %v129 = vmul.f32 %v128, %v127
      %v130 = vld [vmem:[#allocation4] sm:$0xff]
      %v131 = vsub.f32 %v127, %v130
      %v132 = vadd.f32 %v131, %v129
      %vm133 = vcmp.ne.s32.totalorder %v35, 4294967196
      %v134 = vsel %vm133, %v132, 0.0
      %135 = vst.msk [vmem:[%s2] sm:$0xff] %vm90, %v134
      %v136 = vsel %vm133, %v129, 0.0
      %137 = vst.msk [vmem:[%s3] sm:$0xff] %vm90, %v136
    $region21: #{tpu_custom_call.1} parent=1 // pred_fallthru
      _
    // Predicated region
    $region22: #{tpu_custom_call.1} parent=1 // pred_check
      _
    $region23: #{tpu_custom_call.1} parent=1 // pred_check_branch
      %139 = sbr.rel (0) target = $region25
    $region24: #{tpu_custom_call.1} parent=1 // pred_region
      _
    $region25: #{tpu_custom_call.1} parent=1 // pred_fallthru
      _
    // Predicated region
    $region26: #{tpu_custom_call.1} parent=1 // pred_check
      _
    $region27: #{tpu_custom_call.1} parent=1 // pred_check_branch
      %141 = sbr.rel (0) target = $region29
    $region28: #{tpu_custom_call.1} parent=1 // pred_region
      _
    $region29: #{tpu_custom_call.1} parent=1 // pred_fallthru
      _
    // Predicated region
    $region30: #{tpu_custom_call.1} parent=1 // pred_check
      _
    $region31: #{tpu_custom_call.1} parent=1 // pred_check_branch
      %143 = sbr.rel (0) target = $region33
    $region32: #{tpu_custom_call.1} parent=1 // pred_region
      _
    $region33: #{tpu_custom_call.1} parent=1 // pred_fallthru
      _
    // Predicated region
    $region34: #{tpu_custom_call.1} parent=1 // pred_check
      _
    $region35: #{tpu_custom_call.1} parent=1 // pred_check_branch
      %145 = sbr.rel (0) target = $region37
    $region36: #{tpu_custom_call.1} parent=1 // pred_region
      _
    $region37: #{tpu_custom_call.1} parent=1 // pred_fallthru
      _
    %146 = vsyncpa [#allocation6], 1

</llo_original>
